<compile_context>
chip_gen: v7x
topology: tpu7x:2x2x1
jax: 0.10.0
libtpu: 0.0.40
codegen_flags: <defaults>
</compile_context>

<pallas_src>
import math

import jax
import jax.numpy as jnp
from jax.experimental import pallas as pl
from jax.experimental.pallas import tpu as pltpu


# ---------------------------------------------------------------------------
# Shared softmax + output-matmul helper (probs in bf16, f32 accumulation).
# ---------------------------------------------------------------------------
def _softmax_rows_times_v(scores, v_bf16):
    mx = jnp.max(scores, axis=-1, keepdims=True)
    p = jnp.exp(scores - mx)
    denom = jnp.sum(p, axis=-1, keepdims=True)
    r = pl.reciprocal(denom, approx=True)   # EUP slot (off the VPU critical path)
    r = r * (2.0 - denom * r)               # one Newton step for near-exact 1/denom
    p = (p * r).astype(jnp.bfloat16)
    return jnp.dot(p, v_bf16, preferred_element_type=jnp.float32)


# ---------------------------------------------------------------------------
# Fused kernel (fast path, requires S | D).  Per batch b:
#   qv     = X[b] @ [scale*Wq_perm^T | Wv^T] + [scale*bq_perm | bv]  (one wide MXU dot)
#   scores = sum_j q_perm[:, j*S:(j+1)*S] @ v[:, j*S:(j+1)*S]   (== q @ v.view(D, S))
#   out    = softmax(scores) @ v
# The q columns were pre-permuted wrapper-side so every slice above is contiguous.
# ---------------------------------------------------------------------------
def fused_attn_kernel(x_ref, w_ref, b_ref, o_ref):
    seq, d = x_ref.shape[1], x_ref.shape[2]
    m = d // seq                                     # fast path guarantees d % seq == 0

    x = x_ref[0].astype(jnp.bfloat16)                # (S, D)
    qv = jnp.dot(x, w_ref[...], preferred_element_type=jnp.float32) + b_ref[...]
    q = qv[:, :d]            # (S, D) f32, columns permuted + pre-scaled by 1/sqrt(D)
    v = qv[:, d:]            # (S, D) f32, natural column order
    vb = v.astype(jnp.bfloat16)

    scores = jnp.dot(q[:, :seq].astype(jnp.bfloat16),
                     v[:, :seq].astype(jnp.bfloat16),
                     preferred_element_type=jnp.float32)
    for j in range(1, m):
        scores = scores + jnp.dot(
            q[:, j * seq:(j + 1) * seq].astype(jnp.bfloat16),
            v[:, j * seq:(j + 1) * seq].astype(jnp.bfloat16),
            preferred_element_type=jnp.float32)

    o_ref[0] = _softmax_rows_times_v(scores, vb).astype(o_ref.dtype)


# ---------------------------------------------------------------------------
# General fallback kernel (used only when S does not divide D): attention core
# on precomputed (scaled) q, v_view and v.
# ---------------------------------------------------------------------------
def attn_kernel(q_ref, vv_ref, v_ref, o_ref):
    scores = jnp.dot(q_ref[0], vv_ref[0], preferred_element_type=jnp.float32)
    o_ref[0] = _softmax_rows_times_v(scores, v_ref[0]).astype(o_ref.dtype)


# ---------------------------------------------------------------------------
# Wrapper
# ---------------------------------------------------------------------------
def self_attention_forward(X, params):
    B, S, D = X.shape
    dtype = X.dtype
    scale = 1.0 / math.sqrt(D)

    flops = 2 * B * S * D * (2 * D + 2 * S)
    transc = B * S * (S + 1)

    if D % S == 0 and D // S <= 64:
        m = D // S
        # Fold the strided q-column pick (q[:, j::m]) into a free permutation of Wq's
        # rows: new q column d' corresponds to old column (d' % S) * m + (d' // S).
        dperm = (jnp.arange(D) % S) * m + (jnp.arange(D) // S)
        WqT = (params["Wq"][dperm, :] * scale).T                       # (D, D)
        WvT = params["Wv"].T                                           # (D, D)
        Wqv = jnp.concatenate([WqT, WvT], axis=1).astype(jnp.bfloat16)  # (D, 2D)
        bqv = jnp.concatenate([params["bq"][dperm] * scale,
                               params["bv"]]).reshape(1, 2 * D).astype(jnp.float32)

        bytes_accessed = X.size * 4 + Wqv.size * 2 + bqv.size * 4 + B * S * D * 4
        return pl.pallas_call(
            fused_attn_kernel,
            grid=(B,),
            in_specs=[
                pl.BlockSpec((1, S, D), lambda b: (b, 0, 0)),      # X[b] (pipelined)
                pl.BlockSpec((D, 2 * D), lambda b: (0, 0)),        # weights: VMEM-resident
                pl.BlockSpec((1, 2 * D), lambda b: (0, 0)),        # bias:    VMEM-resident
            ],
            out_specs=pl.BlockSpec((1, S, D), lambda b: (b, 0, 0)),
            out_shape=jax.ShapeDtypeStruct((B, S, D), dtype),
            compiler_params=pltpu.CompilerParams(
                dimension_semantics=("parallel",),
                vmem_limit_bytes=32 * 1024 * 1024),   # raise v5e's 16 MiB scoped default
            cost_estimate=pl.CostEstimate(flops=flops, transcendentals=transc,
                                          bytes_accessed=bytes_accessed),
        )(X, Wqv, bqv)

    # ---- General fallback (S does not divide D): projections and the row-major
    # v.view relayout stay in XLA; Pallas runs the attention core per batch. ----
    # TODO(synk): extend the weight-permutation trick to gcd(S, D) blocking so this
    #             path can also be fully fused without an in-kernel reshape.
    q = (X @ (params["Wq"].T * scale) + params["bq"] * scale).astype(jnp.bfloat16)
    v_f32 = X @ params["Wv"].T + params["bv"]
    vv = v_f32.reshape(B, D, S).astype(jnp.bfloat16)
    v = v_f32.astype(jnp.bfloat16)
    bytes_accessed = (q.size + vv.size + v.size) * 2 + B * S * D * 4
    return pl.pallas_call(
        attn_kernel,
        grid=(B,),
        in_specs=[
            pl.BlockSpec((1, S, D), lambda b: (b, 0, 0)),
            pl.BlockSpec((1, D, S), lambda b: (b, 0, 0)),
            pl.BlockSpec((1, S, D), lambda b: (b, 0, 0)),
        ],
        out_specs=pl.BlockSpec((1, S, D), lambda b: (b, 0, 0)),
        out_shape=jax.ShapeDtypeStruct((B, S, D), dtype),
        compiler_params=pltpu.CompilerParams(
            dimension_semantics=("parallel",),
            vmem_limit_bytes=32 * 1024 * 1024),
        cost_estimate=pl.CostEstimate(flops=4 * B * S * S * D, transcendentals=transc,
                                      bytes_accessed=bytes_accessed),
    )(q, vv, v)


# ---------------------------------------------------------------------------
# Pure-JAX reference (mirrors the torch code exactly) for correctness check.
# ---------------------------------------------------------------------------
def ref_forward(X, params):
    B, S, D = X.shape
    q = X @ params["Wq"].T + params["bq"]
    v = X @ params["Wv"].T + params["bv"]
    W = jnp.einsum("bsd,bdt->bst", q, v.reshape(B, D, S)) / math.sqrt(D)
    W = jax.nn.softmax(W, axis=2)
    return jnp.einsum("bst,btd->bsd", W, v)


def init_params(key, D):
    # PyTorch-Linear-style uniform(-1/sqrt(D), 1/sqrt(D)) init.
    # Wk/bk mirror the module's parameters but are dead code in forward().
    bound = 1.0 / math.sqrt(D)
    ks = jax.random.split(key, 6)
    u = lambda k, shape: jax.random.uniform(k, shape, jnp.float32, -bound, bound)
    return {
        "Wq": u(ks[0], (D, D)), "bq": u(ks[1], (D,)),
        "Wk": u(ks[2], (D, D)), "bk": u(ks[3], (D,)),
        "Wv": u(ks[4], (D, D)), "bv": u(ks[5], (D,)),
    }


if __name__ == "__main__":
    B, S, D = 2, 8, 32          # batch, sequence_length, input_dimension
    # attention_heads = 4       # stored by the torch module but unused in forward()

    key = jax.random.PRNGKey(0)
    k_x, k_p = jax.random.split(key)
    X = jax.random.normal(k_x, (B, S, D), dtype=jnp.float32)
    params = init_params(k_p, D)

    out = jax.block_until_ready(self_attention_forward(X, params))
    expected = ref_forward(X, params)

    assert out.shape == (B, S, D)
    # bf16 MXU operands (f32 accumulation) -> relaxed tolerance vs the f32 reference.
    assert jnp.allclose(out, expected, atol=3e-2, rtol=3e-2), "mismatch vs reference"

    print("KERNEL_OK")
</pallas_src>

<mosaic_0001>
module attributes {stable_mosaic.version = 11 : i64} {
  func.func @fused_attn_kernel(%arg0: i32, %arg1: memref<1x8x32xf32, #tpu.memory_space<vmem>>, %arg2: memref<32x64xbf16, #tpu.memory_space<vmem>>, %arg3: memref<1x64xf32, #tpu.memory_space<vmem>>, %arg4: memref<1x8x32xf32, #tpu.memory_space<vmem>>) attributes {dimension_semantics = [#tpu.dimension_semantics<parallel>], iteration_bounds = array<i64: 2>, scalar_prefetch = 0 : i64, scratch_operands = 0 : i64, tpu.core_type = #tpu.core_type<tc>, window_params = [{transform_indices = @transform_0, window_bounds = array<i64: 1, 8, 32>}, {pipeline_mode = #tpu.pipeline_mode<synchronous>, transform_indices = @transform_1, window_bounds = array<i64: 32, 64>}, {pipeline_mode = #tpu.pipeline_mode<synchronous>, transform_indices = @transform_2, window_bounds = array<i64: 1, 64>}, {transform_indices = @transform_3, window_bounds = array<i64: 1, 8, 32>}]} {
    %c0 = arith.constant 0 : index
    %c0_0 = arith.constant 0 : index
    %c0_1 = arith.constant 0 : index
    %0 = vector.load %arg1[%c0, %c0_0, %c0_1] : memref<1x8x32xf32, #tpu.memory_space<vmem>>, vector<1x8x32xf32>
    %1 = vector.shape_cast %0 : vector<1x8x32xf32> to vector<8x32xf32>
    %2 = arith.truncf %1 : vector<8x32xf32> to vector<8x32xbf16>
    %c0_2 = arith.constant 0 : index
    %c0_3 = arith.constant 0 : index
    %3 = vector.load %arg2[%c0_2, %c0_3] : memref<32x64xbf16, #tpu.memory_space<vmem>>, vector<32x64xbf16>
    %cst = arith.constant dense<0.000000e+00> : vector<8x64xf32>
    %4 = tpu.matmul %2, %3, %cst {dimension_numbers = #tpu.dot_dimension_numbers<[1], [0], [0], [1], [0, 0, 1, 1], [], []>} : vector<8x32xbf16>, vector<32x64xbf16>, vector<8x64xf32> -> vector<8x64xf32>
    %c0_4 = arith.constant 0 : index
    %c0_5 = arith.constant 0 : index
    %5 = vector.load %arg3[%c0_4, %c0_5] : memref<1x64xf32, #tpu.memory_space<vmem>>, vector<1x64xf32>
    %6 = vector.broadcast %5 : vector<1x64xf32> to vector<8x64xf32>
    %7 = arith.addf %4, %6 : vector<8x64xf32>
    %8 = vector.extract_strided_slice %7 {offsets = [0, 0], sizes = [8, 32], strides = [1, 1]} : vector<8x64xf32> to vector<8x32xf32>
    %9 = vector.extract_strided_slice %7 {offsets = [0, 32], sizes = [8, 32], strides = [1, 1]} : vector<8x64xf32> to vector<8x32xf32>
    %10 = arith.truncf %9 : vector<8x32xf32> to vector<8x32xbf16>
    %11 = vector.extract_strided_slice %8 {offsets = [0, 0], sizes = [8, 8], strides = [1, 1]} : vector<8x32xf32> to vector<8x8xf32>
    %12 = arith.truncf %11 : vector<8x8xf32> to vector<8x8xbf16>
    %13 = vector.extract_strided_slice %9 {offsets = [0, 0], sizes = [8, 8], strides = [1, 1]} : vector<8x32xf32> to vector<8x8xf32>
    %14 = arith.truncf %13 : vector<8x8xf32> to vector<8x8xbf16>
    %cst_6 = arith.constant dense<0.000000e+00> : vector<8x8xf32>
    %15 = tpu.matmul %12, %14, %cst_6 {dimension_numbers = #tpu.dot_dimension_numbers<[1], [0], [0], [1], [0, 0, 1, 1], [], []>} : vector<8x8xbf16>, vector<8x8xbf16>, vector<8x8xf32> -> vector<8x8xf32>
    %16 = vector.extract_strided_slice %8 {offsets = [0, 8], sizes = [8, 8], strides = [1, 1]} : vector<8x32xf32> to vector<8x8xf32>
    %17 = arith.truncf %16 : vector<8x8xf32> to vector<8x8xbf16>
    %18 = vector.extract_strided_slice %9 {offsets = [0, 8], sizes = [8, 8], strides = [1, 1]} : vector<8x32xf32> to vector<8x8xf32>
    %19 = arith.truncf %18 : vector<8x8xf32> to vector<8x8xbf16>
    %cst_7 = arith.constant dense<0.000000e+00> : vector<8x8xf32>
    %20 = tpu.matmul %17, %19, %cst_7 {dimension_numbers = #tpu.dot_dimension_numbers<[1], [0], [0], [1], [0, 0, 1, 1], [], []>} : vector<8x8xbf16>, vector<8x8xbf16>, vector<8x8xf32> -> vector<8x8xf32>
    %21 = arith.addf %15, %20 : vector<8x8xf32>
    %22 = vector.extract_strided_slice %8 {offsets = [0, 16], sizes = [8, 8], strides = [1, 1]} : vector<8x32xf32> to vector<8x8xf32>
    %23 = arith.truncf %22 : vector<8x8xf32> to vector<8x8xbf16>
    %24 = vector.extract_strided_slice %9 {offsets = [0, 16], sizes = [8, 8], strides = [1, 1]} : vector<8x32xf32> to vector<8x8xf32>
    %25 = arith.truncf %24 : vector<8x8xf32> to vector<8x8xbf16>
    %cst_8 = arith.constant dense<0.000000e+00> : vector<8x8xf32>
    %26 = tpu.matmul %23, %25, %cst_8 {dimension_numbers = #tpu.dot_dimension_numbers<[1], [0], [0], [1], [0, 0, 1, 1], [], []>} : vector<8x8xbf16>, vector<8x8xbf16>, vector<8x8xf32> -> vector<8x8xf32>
    %27 = arith.addf %21, %26 : vector<8x8xf32>
    %28 = vector.extract_strided_slice %8 {offsets = [0, 24], sizes = [8, 8], strides = [1, 1]} : vector<8x32xf32> to vector<8x8xf32>
    %29 = arith.truncf %28 : vector<8x8xf32> to vector<8x8xbf16>
    %30 = vector.extract_strided_slice %9 {offsets = [0, 24], sizes = [8, 8], strides = [1, 1]} : vector<8x32xf32> to vector<8x8xf32>
    %31 = arith.truncf %30 : vector<8x8xf32> to vector<8x8xbf16>
    %cst_9 = arith.constant dense<0.000000e+00> : vector<8x8xf32>
    %32 = tpu.matmul %29, %31, %cst_9 {dimension_numbers = #tpu.dot_dimension_numbers<[1], [0], [0], [1], [0, 0, 1, 1], [], []>} : vector<8x8xbf16>, vector<8x8xbf16>, vector<8x8xf32> -> vector<8x8xf32>
    %33 = arith.addf %27, %32 : vector<8x8xf32>
    %cst_10 = arith.constant dense<0xFF800000> : vector<8xf32>
    %34 = vector.multi_reduction <maximumf>, %33, %cst_10 [1] : vector<8x8xf32> to vector<8xf32>
    %35 = vector.shape_cast %34 : vector<8xf32> to vector<8x1xf32>
    %36 = vector.broadcast %35 : vector<8x1xf32> to vector<8x8xf32>
    %37 = arith.subf %33, %36 : vector<8x8xf32>
    %38 = math.exp %37 : vector<8x8xf32>
    %cst_11 = arith.constant dense<0.000000e+00> : vector<8xf32>
    %39 = vector.multi_reduction <add>, %38, %cst_11 [1] : vector<8x8xf32> to vector<8xf32>
    %40 = vector.shape_cast %39 : vector<8xf32> to vector<8x1xf32>
    %41 = tpu.reciprocal %40 {approx = true} : vector<8x1xf32> -> vector<8x1xf32>
    %42 = arith.mulf %40, %41 : vector<8x1xf32>
    %cst_12 = arith.constant 2.000000e+00 : f32
    %43 = vector.broadcast %cst_12 : f32 to vector<8x1xf32>
    %44 = arith.subf %43, %42 : vector<8x1xf32>
    %45 = arith.mulf %41, %44 : vector<8x1xf32>
    %46 = vector.broadcast %45 : vector<8x1xf32> to vector<8x8xf32>
    %47 = arith.mulf %38, %46 : vector<8x8xf32>
    %48 = arith.truncf %47 : vector<8x8xf32> to vector<8x8xbf16>
    %cst_13 = arith.constant dense<0.000000e+00> : vector<8x32xf32>
    %49 = tpu.matmul %48, %10, %cst_13 {dimension_numbers = #tpu.dot_dimension_numbers<[1], [0], [0], [1], [0, 0, 1, 1], [], []>} : vector<8x8xbf16>, vector<8x32xbf16>, vector<8x32xf32> -> vector<8x32xf32>
    %c0_14 = arith.constant 0 : index
    %c0_15 = arith.constant 0 : index
    %c0_16 = arith.constant 0 : index
    %50 = vector.load %arg4[%c0_14, %c0_15, %c0_16] : memref<1x8x32xf32, #tpu.memory_space<vmem>>, vector<1x8x32xf32>
    %51 = vector.shape_cast %50 : vector<1x8x32xf32> to vector<8x32xf32>
    %52 = vector.shape_cast %49 : vector<8x32xf32> to vector<1x8x32xf32>
    tpu.vector_store %arg4[%c0_14, %c0_15, %c0_16], %52 {strides = array<i32>} : memref<1x8x32xf32, #tpu.memory_space<vmem>>, vector<1x8x32xf32>,
    return
  }
  func.func @transform_0(%arg0: i32) -> (i32, i32, i32) {
    %c0_i32 = arith.constant 0 : i32
    %c0_i32_0 = arith.constant 0 : i32
    %c0_i32_1 = arith.constant 0 : i32
    return %arg0, %c0_i32, %c0_i32_0 : i32, i32, i32
  }
  func.func @transform_1(%arg0: i32) -> (i32, i32) {
    %c0_i32 = arith.constant 0 : i32
    %c0_i32_0 = arith.constant 0 : i32
    %c0_i32_1 = arith.constant 0 : i32
    return %c0_i32, %c0_i32_0 : i32, i32
  }
  func.func @transform_2(%arg0: i32) -> (i32, i32) {
    %c0_i32 = arith.constant 0 : i32
    %c0_i32_0 = arith.constant 0 : i32
    %c0_i32_1 = arith.constant 0 : i32
    return %c0_i32, %c0_i32_0 : i32, i32
  }
  func.func @transform_3(%arg0: i32) -> (i32, i32, i32) {
    %c0_i32 = arith.constant 0 : i32
    %c0_i32_0 = arith.constant 0 : i32
    %c0_i32_1 = arith.constant 0 : i32
    return %arg0, %c0_i32, %c0_i32_0 : i32, i32, i32
  }
}

</mosaic_0001>

<llo_original>
// kernel: tpu_custom_call.1
$region0: #{tpu_custom_call.1}
  #allocation0 [shape = 'u32[]', space=smem, size = 0x4, offset = 0x4, fixed_abs, tag = 'smem constant byte address 0x4 - core index']
  #allocation1 [shape = 'u32[144,128]{1,0:T(1,128)}', space=vmem, size = 0x12000, scoped, tag = 'internal scratch']
  %s0 = inlined_call_operand.hbm [shape: f32[2,8,32], index: 0, kind: input, shape index: {}]
  %s1 = inlined_call_operand.hbm [shape: bf16[32,64], index: 1, kind: input, shape index: {}]
  %s2 = inlined_call_operand.vmem [shape: f32[1,64], index: 2, kind: input, shape index: {}]
  %s3 = inlined_call_operand.hbm [shape: f32[2,8,32], index: 3, kind: output, shape index: {}]
  %s4 = sld [smem:[#allocation0]]
  $region53: #{tpu_custom_call.1} parent=0
    _
  %s6 = ssub.s32 1, %s4
  %s7 = scalar_select 0, %s6, %s4
  $region1: #{tpu_custom_call.1} parent=0
    #allocation2 [shape = 'u8[8192]{0}', space=vmem, size = 0x2000, scoped, tag = 'input window, operand 0']
    #allocation3 [shape = 's32[2]{0}', space=sflag, size = 0x8, scoped, tag = 'scoped memory for tpu_custom_call.1']
    #allocation4 [shape = 's32[2]{0}', space=sflag, size = 0x8, scoped, tag = 'scoped memory for tpu_custom_call.1']
    #allocation5 [shape = 'u8[8192]{0}', space=vmem, size = 0x2000, scoped, tag = 'input window, operand 1, single buffered']
    #allocation6 [shape = 's32[1]{0}', space=sflag, size = 0x4, scoped, tag = 'scoped memory for tpu_custom_call.1']
    #allocation7 [shape = 'u8[8192]{0}', space=vmem, size = 0x2000, scoped, tag = 'output window, operand 0']
    %8 = vsyncpa [#allocation3], 0
    %s9 = scalar_lea.sflag [#allocation3], 1
    %10 = vsyncpa %s9, 0
    %11 = vsyncpa [#allocation6], 0
    %12 = vsyncpa [#allocation4], 0
    %s13 = scalar_lea.sflag [#allocation4], 1
    %14 = vsyncpa %s13, 0
    loop: start=0, step=1, limit=4
    $region2: #{tpu_custom_call.1} parent=1 // loop_pre_header
      _
    $region3: #{tpu_custom_call.1} parent=1 // loop_header
      %s16 = sphi 0, %s20
      %p17 = scmp.ge.s32.totalorder %s16, 4
      %s26 = sphi 0, %s28
      %s29 = sphi 0, %s26
      %s30 = sphi 0, %s29
      %s46 = sphi 0, %s30
      %s50 = sphi 0, %s50
      %s52 = sphi 0, %s50
      %s53 = sphi 0, %s52
      %s67 = sphi 0, %s53
      %s71 = sphi 0, %s71
      %s73 = sphi 0, %s71
      %s74 = sphi 0, %s73
      %s88 = sphi 0, %s74
      %s94 = sphi 0, %s96
      %s97 = sphi 0, %s94
      %s98 = sphi 0, %s97
      %s114 = sphi 0, %s98
    $region4: #{tpu_custom_call.1} parent=1 // loop_header_branch
      %19 = sbr.rel (%p17) target = $region8
    $region5: #{tpu_custom_call.1} parent=1 // loop_body
      %s21 = ssub.s32 %s16, 1
      %s22 = ssub.s32 %s16, 2
      %s23 = sadd.s32 %s16, 1
      %s24 = ssub.s32 %s16, %s23
      %p25 = scmp.eq.s32.totalorder %s24, 0
      %s27 = sadd.s32 %s26, 1
      %s28 = scalar_select %p25, %s26, %s27
      %p31 = pneg %p25
      %p32 = scmp.eq.s32.totalorder %s16, 1
      %p33 = por %p31, %p32
      %p34 = scmp.ne.s32.totalorder %s26, %s29
      %p35 = scmp.eq.s32.totalorder %s16, 0
      %p36 = por %p34, %p35
      %p37 = scmp.ne.s32.totalorder %s26, %s29
      %p38 = scmp.eq.s32.totalorder %s21, 1
      %p39 = por %p37, %p38
      %p40 = scmp.ne.s32.totalorder %s29, %s30
      %p41 = scmp.eq.s32.totalorder %s21, 0
      %p42 = por %p40, %p41
      %p43 = scmp.ne.s32.totalorder %s29, %s30
      %p44 = scmp.eq.s32.totalorder %s22, 1
      %p45 = por %p43, %p44
      %p47 = scmp.ne.s32.totalorder %s30, %s46
      %p48 = scmp.eq.s32.totalorder %s22, 0
      %p49 = por %p47, %p48
      %s51 = sadd.s32 %s50, 1
      %p54 = scmp.eq.s32.totalorder %s16, 1
      %p55 = scmp.ne.s32.totalorder %s50, %s52
      %p56 = scmp.eq.s32.totalorder %s16, 0
      %p57 = por %p55, %p56
      %p58 = scmp.ne.s32.totalorder %s50, %s52
      %p59 = scmp.eq.s32.totalorder %s21, 1
      %p60 = por %p58, %p59
      %p61 = scmp.ne.s32.totalorder %s52, %s53
      %p62 = scmp.eq.s32.totalorder %s21, 0
      %p63 = por %p61, %p62
      %p64 = scmp.ne.s32.totalorder %s52, %s53
      %p65 = scmp.eq.s32.totalorder %s22, 1
      %p66 = por %p64, %p65
      %p68 = scmp.ne.s32.totalorder %s53, %s67
      %p69 = scmp.eq.s32.totalorder %s22, 0
      %p70 = por %p68, %p69
      %s72 = sadd.s32 %s71, 1
      %p75 = scmp.eq.s32.totalorder %s16, 1
      %p76 = scmp.ne.s32.totalorder %s71, %s73
      %p77 = scmp.eq.s32.totalorder %s16, 0
      %p78 = por %p76, %p77
      %p79 = scmp.ne.s32.totalorder %s71, %s73
      %p80 = scmp.eq.s32.totalorder %s21, 1
      %p81 = por %p79, %p80
      %p82 = scmp.ne.s32.totalorder %s73, %s74
      %p83 = scmp.eq.s32.totalorder %s21, 0
      %p84 = por %p82, %p83
      %p85 = scmp.ne.s32.totalorder %s73, %s74
      %p86 = scmp.eq.s32.totalorder %s22, 1
      %p87 = por %p85, %p86
      %p89 = scmp.ne.s32.totalorder %s74, %s88
      %p90 = scmp.eq.s32.totalorder %s22, 0
      %p91 = por %p89, %p90
      %s92 = ssub.s32 %s16, %s23
      %p93 = scmp.eq.s32.totalorder %s92, 0
      %s95 = sadd.s32 %s94, 1
      %s96 = scalar_select %p93, %s94, %s95
      %p99 = pneg %p93
      %p100 = scmp.eq.s32.totalorder %s16, 1
      %p101 = por %p99, %p100
      %p102 = scmp.ne.s32.totalorder %s94, %s97
      %p103 = scmp.eq.s32.totalorder %s16, 0
      %p104 = por %p102, %p103
      %p105 = scmp.ne.s32.totalorder %s94, %s97
      %p106 = scmp.eq.s32.totalorder %s21, 1
      %p107 = por %p105, %p106
      %p108 = scmp.ne.s32.totalorder %s97, %s98
      %p109 = scmp.eq.s32.totalorder %s21, 0
      %p110 = por %p108, %p109
      %p111 = scmp.ne.s32.totalorder %s97, %s98
      %p112 = scmp.eq.s32.totalorder %s22, 1
      %p113 = por %p111, %p112
      %p115 = scmp.ne.s32.totalorder %s98, %s114
      %p116 = scmp.eq.s32.totalorder %s22, 0
      %p117 = por %p115, %p116
      %p118 = scmp.le.s32.totalorder 1, %s16
      %p119 = scmp.lt.s32.totalorder %s16, 3
      %p120 = pnand %p118, %p119
      %p121 = pneg %p120
      // Predicated region
      $region9: #{tpu_custom_call.1} parent=5 // pred_check
        _
      $region10: #{tpu_custom_call.1} parent=5 // pred_check_branch
        %123 = sbr.rel (%p120) target = $region12
      $region11: #{tpu_custom_call.1} parent=5 // pred_region
        %s124 = ssub.s32 %s16, 1
        // Predicated region
        $region13: #{tpu_custom_call.1} parent=11 // pred_check
          %p125 = pneg %p63
        $region14: #{tpu_custom_call.1} parent=11 // pred_check_branch
          %127 = sbr.rel (%p125) target = $region16
        $region15: #{tpu_custom_call.1} parent=11 // pred_region
          %s129 = ssub.s32 256, 256
          %130 = vsyncadd [#allocation6], %s129
          %s131 = sshll.u32 [#allocation5], 4
          %s132 = int_to_ptr.vmem [resolvable:$true] %s131
          %137 = dma.hbm_to_vmem [thread:$0]  %s1, 256, %s132, [#allocation6], 64, 64, 4
        $region16: #{tpu_custom_call.1} parent=11 // pred_fallthru
          _
        // Predicated region
        $region17: #{tpu_custom_call.1} parent=11 // pred_check
          %p138 = pneg %p84
        $region18: #{tpu_custom_call.1} parent=11 // pred_check_branch
          %140 = sbr.rel (%p138) target = $region20
        $region19: #{tpu_custom_call.1} parent=11 // pred_region
          _
        $region20: #{tpu_custom_call.1} parent=11 // pred_fallthru
          _
      $region12: #{tpu_custom_call.1} parent=5 // pred_fallthru
        _
      %p141 = scmp.lt.s32.totalorder %s16, 2
      // Predicated region
      $region21: #{tpu_custom_call.1} parent=5 // pred_check
        %p142 = pneg %p141
      $region22: #{tpu_custom_call.1} parent=5 // pred_check_branch
        %144 = sbr.rel (%p142) target = $region24
      $region23: #{tpu_custom_call.1} parent=5 // pred_region
        // Predicated region
        $region25: #{tpu_custom_call.1} parent=23 // pred_check
          %p145 = pneg %p36
        $region26: #{tpu_custom_call.1} parent=23 // pred_check_branch
          %147 = sbr.rel (%p145) target = $region28
        $region27: #{tpu_custom_call.1} parent=23 // pred_region
          %s148 = sand.u32 %s26, 1
          %s149 = scalar_lea.sflag [#allocation3], %s148
          %s150 = sand.u32 %s26, 1
          %s151 = smul.addr %s150, 8
          %s152 = scalar_lea.vmem [#allocation2], %s151
          %s154 = ssub.s32 128, 128
          %155 = vsyncadd %s149, %s154
          %s156 = smul.addr %s16, 128
          %s157 = scalar_lea.hbm %s0, %s156
          %s159 = sshll.u32 %s152, 4
          %s160 = int_to_ptr.vmem [resolvable:$true] %s159
          %162 = dma.hbm_to_vmem [thread:$0]  %s157, 128, %s160, %s149
        $region28: #{tpu_custom_call.1} parent=23 // pred_fallthru
          _
      $region24: #{tpu_custom_call.1} parent=5 // pred_fallthru
        _
      %p163 = scmp.le.s32.totalorder 1, %s16
      %p164 = scmp.lt.s32.totalorder %s16, 3
      %p165 = pnand %p163, %p164
      %p166 = pneg %p165
      // Predicated region
      $region29: #{tpu_custom_call.1} parent=5 // pred_check
        _
      $region30: #{tpu_custom_call.1} parent=5 // pred_check_branch
        %168 = sbr.rel (%p165) target = $region32
      $region31: #{tpu_custom_call.1} parent=5 // pred_region
        %s169 = ssub.s32 %s16, 1
        %s170 = sand.u32 %s29, 1
        %s171 = scalar_lea.sflag [#allocation3], %s170
        %s172 = sand.u32 %s29, 1
        %s173 = smul.addr %s172, 8
        %s174 = scalar_lea.vmem [#allocation2], %s173
        // Predicated region
        $region33: #{tpu_custom_call.1} parent=31 // pred_check
          %p175 = pneg %p42
        $region34: #{tpu_custom_call.1} parent=31 // pred_check_branch
          %177 = sbr.rel (%p175) target = $region36
        $region35: #{tpu_custom_call.1} parent=31 // pred_region
          %178 = dma.done %s171, 128
        $region36: #{tpu_custom_call.1} parent=31 // pred_fallthru
          _
        // Predicated region
        $region37: #{tpu_custom_call.1} parent=31 // pred_check
          %p179 = pneg %p63
        $region38: #{tpu_custom_call.1} parent=31 // pred_check_branch
          %181 = sbr.rel (%p179) target = $region40
        $region39: #{tpu_custom_call.1} parent=31 // pred_region
          %182 = dma.done [#allocation6], 256
        $region40: #{tpu_custom_call.1} parent=31 // pred_fallthru
          _
        %s183 = sand.u32 %s29, 1
        %s184 = scalar_lea.sflag [#allocation3], %s183
        %s185 = sand.u32 %s29, 1
        %s186 = smul.addr %s185, 8
        %s187 = scalar_lea.vmem [#allocation2], %s186
        %p188 = pneg %p42
        %p189 = pneg %p39
        %p190 = pneg %p63
        %p191 = pneg %p60
        %p192 = pneg %p84
        %p193 = pneg %p81
        %p194 = pneg %p110
        %p195 = pneg %p107
        %s196 = sand.u32 %s97, 1
        %s197 = scalar_lea.sflag [#allocation4], %s196
        %s198 = sand.u32 %s97, 1
        %s199 = smul.addr %s198, 8
        %s200 = scalar_lea.vmem [#allocation7], %s199
        %v202 = vld [vmem:[%s174] sm:$0xff]
        %v203 = vpack.c.bf16 %v202, %v202
        %v204 = vld [vmem:[#allocation5] sm:$0xf]
        %v205 = vld [vmem:[#allocation5 + $0x4] sm:$0xf]
        %v206 = vld [vmem:[#allocation5 + $0x8] sm:$0xf]
        %v207 = vld [vmem:[#allocation5 + $0xc] sm:$0xf]
        %v208 = vld [vmem:[%s2] sm:$0x1]
        %v210 = vlaneseq
        %v211 = vshrl.u32 %v210, 7
        %v212 = vsub.s32 0, %v211
        %v213 = vrot.slane %v208, %v212
        %v219 = vunpack.c.l.b16 %v204
        %v220 = vunpack.c.l.b16 %v205
        %v221 = vunpack.c.l.b16 %v206
        %v222 = vunpack.c.l.b16 %v207
        %v223 = vpack.c.b16 %v220, %v219
        %v224 = vpack.c.b16 %v222, %v221
        %vm227 = vcmask 261120
        %v229 = vsel %vm227, %v203, 0
        %231 = vmatprep.subr.bf16.mxu0 0
        %232 = vmatpush1.bf16.msra.mxu0 %v223
        %233 = vmatprep.subr.bf16.mxu0 0
        %234 = vmatpush1.bf16.msra.mxu0 %v224
        %235 = vmatprep.subr.bf16.mxu0 0
        %236 = vmatpush1.bf16.msra.mxu0 0
        %237 = vmatprep.subr.bf16.mxu0 0
        %238 = vmatpush1.bf16.msra.mxu0 0
        %239 = vmatprep.subr.bf16.mxu0 0
        %240 = vmatpush1.bf16.msra.mxu0 0
        %241 = vmatprep.subr.bf16.mxu0 0
        %242 = vmatpush1.bf16.msra.mxu0 0
        %243 = vmatprep.subr.bf16.mxu0 0
        %244 = vmatpush1.bf16.msra.mxu0 0
        %245 = vmatprep.subr.bf16.mxu0 0
        %246 = vmatpush1.bf16.msra.mxu0 0
        %247 = vmatprep.subr.bf16.mxu0 0
        %248 = vmatpush1.bf16.msra.mxu0 0
        %249 = vmatprep.subr.bf16.mxu0 0
        %250 = vmatpush1.bf16.msra.mxu0 0
        %251 = vmatprep.subr.bf16.mxu0 0
        %252 = vmatpush1.bf16.msra.mxu0 0
        %253 = vmatprep.subr.bf16.mxu0 0
        %254 = vmatpush1.bf16.msra.mxu0 0
        %255 = vmatprep.subr.bf16.mxu0 0
        %256 = vmatpush1.bf16.msra.mxu0 0
        %257 = vmatprep.subr.bf16.mxu0 0
        %258 = vmatpush1.bf16.msra.mxu0 0
        %259 = vmatprep.subr.bf16.mxu0 0
        %260 = vmatpush1.bf16.msra.mxu0 0
        %261 = vmatprep.subr.bf16.mxu0 0
        %262 = vmatpush1.bf16.msra.mxu0 0
        %263 = vmatprep.mubr.bf16.mxu0 0
        %264 = vmatmul.mubr.bf16.gmra.mrb[0].mxu0 %v229
        %v265 = vpop.f32.mrb[0].mxu0
        %v266 = vadd.f32 %v213, %v265
        %v267 = vpop.f32.mrb[0].mxu0
        %v268 = vpop.f32.mrb[0].mxu0
        %v269 = vpop.f32.mrb[0].mxu0
        %270 = vdwg.mxu0
        %v271 = vpack.c.bf16 %v266, %v266
        %273 = vrot.lane.b32.xlu0 %v271, 120
        %v274 = vpop.permute.xlu0 %273
        %275 = vrot.lane.b32.xlu0 %v271, 88
        %v276 = vpop.permute.xlu0 %275
        %vm277 = vcmask 64512
        %v279 = vsel %vm277, %v274, 0
        %vm281 = vcmask 1043456
        %v283 = vsel %vm281, %v276, 0
        %285 = vmatprep.subr.bf16.mxu0 0
        %286 = vmatpush1.bf16.msra.mxu0 %v283
        %287 = vmatprep.subr.bf16.mxu0 0
        %288 = vmatpush1.bf16.msra.mxu0 0
        %289 = vmatprep.subr.bf16.mxu0 0
        %290 = vmatpush1.bf16.msra.mxu0 0
        %291 = vmatprep.subr.bf16.mxu0 0
        %292 = vmatpush1.bf16.msra.mxu0 0
        %293 = vmatprep.subr.bf16.mxu0 0
        %294 = vmatpush1.bf16.msra.mxu0 0
        %295 = vmatprep.subr.bf16.mxu0 0
        %296 = vmatpush1.bf16.msra.mxu0 0
        %297 = vmatprep.subr.bf16.mxu0 0
        %298 = vmatpush1.bf16.msra.mxu0 0
        %299 = vmatprep.subr.bf16.mxu0 0
        %300 = vmatpush1.bf16.msra.mxu0 0
        %301 = vmatprep.subr.bf16.mxu0 0
        %302 = vmatpush1.bf16.msra.mxu0 0
        %303 = vmatprep.subr.bf16.mxu0 0
        %304 = vmatpush1.bf16.msra.mxu0 0
        %305 = vmatprep.subr.bf16.mxu0 0
        %306 = vmatpush1.bf16.msra.mxu0 0
        %307 = vmatprep.subr.bf16.mxu0 0
        %308 = vmatpush1.bf16.msra.mxu0 0
        %309 = vmatprep.subr.bf16.mxu0 0
        %310 = vmatpush1.bf16.msra.mxu0 0
        %311 = vmatprep.subr.bf16.mxu0 0
        %312 = vmatpush1.bf16.msra.mxu0 0
        %313 = vmatprep.subr.bf16.mxu0 0
        %314 = vmatpush1.bf16.msra.mxu0 0
        %315 = vmatprep.subr.bf16.mxu0 0
        %316 = vmatpush1.bf16.msra.mxu0 0
        %317 = vmatprep.mubr.bf16.mxu0 0
        %318 = vmatmul.mubr.bf16.gmra.mrb[0].mxu0 %v279
        %v319 = vpop.f32.mrb[0].mxu0
        %v320 = vadd.f32 0.0, %v319
        %v321 = vpop.f32.mrb[0].mxu0
        %v322 = vpop.f32.mrb[0].mxu0
        %v323 = vpop.f32.mrb[0].mxu0
        %324 = vdwg.mxu0
        %325 = vrot.lane.b32.xlu0 %v271, 96
        %v326 = vpop.permute.xlu0 %325
        %v328 = vsel %vm277, %v271, 0
        %v331 = vsel %vm281, %v326, 0
        %333 = vmatprep.subr.bf16.mxu0 0
        %334 = vmatpush1.bf16.msra.mxu0 %v331
        %335 = vmatprep.subr.bf16.mxu0 0
        %336 = vmatpush1.bf16.msra.mxu0 0
        %337 = vmatprep.subr.bf16.mxu0 0
        %338 = vmatpush1.bf16.msra.mxu0 0
        %339 = vmatprep.subr.bf16.mxu0 0
        %340 = vmatpush1.bf16.msra.mxu0 0
        %341 = vmatprep.subr.bf16.mxu0 0
        %342 = vmatpush1.bf16.msra.mxu0 0
        %343 = vmatprep.subr.bf16.mxu0 0
        %344 = vmatpush1.bf16.msra.mxu0 0
        %345 = vmatprep.subr.bf16.mxu0 0
        %346 = vmatpush1.bf16.msra.mxu0 0
        %347 = vmatprep.subr.bf16.mxu0 0
        %348 = vmatpush1.bf16.msra.mxu0 0
        %349 = vmatprep.subr.bf16.mxu0 0
        %350 = vmatpush1.bf16.msra.mxu0 0
        %351 = vmatprep.subr.bf16.mxu0 0
        %352 = vmatpush1.bf16.msra.mxu0 0
        %353 = vmatprep.subr.bf16.mxu0 0
        %354 = vmatpush1.bf16.msra.mxu0 0
        %355 = vmatprep.subr.bf16.mxu0 0
        %356 = vmatpush1.bf16.msra.mxu0 0
        %357 = vmatprep.subr.bf16.mxu0 0
        %358 = vmatpush1.bf16.msra.mxu0 0
        %359 = vmatprep.subr.bf16.mxu0 0
        %360 = vmatpush1.bf16.msra.mxu0 0
        %361 = vmatprep.subr.bf16.mxu0 0
        %362 = vmatpush1.bf16.msra.mxu0 0
        %363 = vmatprep.subr.bf16.mxu0 0
        %364 = vmatpush1.bf16.msra.mxu0 0
        %365 = vmatprep.mubr.bf16.mxu0 0
        %366 = vmatmul.mubr.bf16.gmra.mrb[0].mxu0 %v328
        %v367 = vpop.f32.mrb[0].mxu0
        %v368 = vadd.f32 %v320, %v367
        %v369 = vpop.f32.mrb[0].mxu0
        %v370 = vpop.f32.mrb[0].mxu0
        %v371 = vpop.f32.mrb[0].mxu0
        %372 = vdwg.mxu0
        %373 = vrot.lane.b32.xlu0 %v271, 112
        %v374 = vpop.permute.xlu0 %373
        %375 = vrot.lane.b32.xlu0 %v271, 80
        %v376 = vpop.permute.xlu0 %375
        %v378 = vsel %vm277, %v374, 0
        %v381 = vsel %vm281, %v376, 0
        %383 = vmatprep.subr.bf16.mxu0 0
        %384 = vmatpush1.bf16.msra.mxu0 %v381
        %385 = vmatprep.subr.bf16.mxu0 0
        %386 = vmatpush1.bf16.msra.mxu0 0
        %387 = vmatprep.subr.bf16.mxu0 0
        %388 = vmatpush1.bf16.msra.mxu0 0
        %389 = vmatprep.subr.bf16.mxu0 0
        %390 = vmatpush1.bf16.msra.mxu0 0
        %391 = vmatprep.subr.bf16.mxu0 0
        %392 = vmatpush1.bf16.msra.mxu0 0
        %393 = vmatprep.subr.bf16.mxu0 0
        %394 = vmatpush1.bf16.msra.mxu0 0
        %395 = vmatprep.subr.bf16.mxu0 0
        %396 = vmatpush1.bf16.msra.mxu0 0
        %397 = vmatprep.subr.bf16.mxu0 0
        %398 = vmatpush1.bf16.msra.mxu0 0
        %399 = vmatprep.subr.bf16.mxu0 0
        %400 = vmatpush1.bf16.msra.mxu0 0
        %401 = vmatprep.subr.bf16.mxu0 0
        %402 = vmatpush1.bf16.msra.mxu0 0
        %403 = vmatprep.subr.bf16.mxu0 0
        %404 = vmatpush1.bf16.msra.mxu0 0
        %405 = vmatprep.subr.bf16.mxu0 0
        %406 = vmatpush1.bf16.msra.mxu0 0
        %407 = vmatprep.subr.bf16.mxu0 0
        %408 = vmatpush1.bf16.msra.mxu0 0
        %409 = vmatprep.subr.bf16.mxu0 0
        %410 = vmatpush1.bf16.msra.mxu0 0
        %411 = vmatprep.subr.bf16.mxu0 0
        %412 = vmatpush1.bf16.msra.mxu0 0
        %413 = vmatprep.subr.bf16.mxu0 0
        %414 = vmatpush1.bf16.msra.mxu0 0
        %415 = vmatprep.mubr.bf16.mxu0 0
        %416 = vmatmul.mubr.bf16.gmra.mrb[0].mxu0 %v378
        %v417 = vpop.f32.mrb[0].mxu0
        %v418 = vadd.f32 0.0, %v417
        %v419 = vpop.f32.mrb[0].mxu0
        %v420 = vpop.f32.mrb[0].mxu0
        %v421 = vpop.f32.mrb[0].mxu0
        %422 = vdwg.mxu0
        %v423 = vadd.f32 %v368, %v418
        %424 = vrot.lane.b32.xlu0 %v271, 104
        %v425 = vpop.permute.xlu0 %424
        %426 = vrot.lane.b32.xlu0 %v271, 72
        %v427 = vpop.permute.xlu0 %426
        %v429 = vsel %vm277, %v425, 0
        %v432 = vsel %vm281, %v427, 0
        %434 = vmatprep.subr.bf16.mxu0 0
        %435 = vmatpush1.bf16.msra.mxu0 %v432
        %436 = vmatprep.subr.bf16.mxu0 0
        %437 = vmatpush1.bf16.msra.mxu0 0
        %438 = vmatprep.subr.bf16.mxu0 0
        %439 = vmatpush1.bf16.msra.mxu0 0
        %440 = vmatprep.subr.bf16.mxu0 0
        %441 = vmatpush1.bf16.msra.mxu0 0
        %442 = vmatprep.subr.bf16.mxu0 0
        %443 = vmatpush1.bf16.msra.mxu0 0
        %444 = vmatprep.subr.bf16.mxu0 0
        %445 = vmatpush1.bf16.msra.mxu0 0
        %446 = vmatprep.subr.bf16.mxu0 0
        %447 = vmatpush1.bf16.msra.mxu0 0
        %448 = vmatprep.subr.bf16.mxu0 0
        %449 = vmatpush1.bf16.msra.mxu0 0
        %450 = vmatprep.subr.bf16.mxu0 0
        %451 = vmatpush1.bf16.msra.mxu0 0
        %452 = vmatprep.subr.bf16.mxu0 0
        %453 = vmatpush1.bf16.msra.mxu0 0
        %454 = vmatprep.subr.bf16.mxu0 0
        %455 = vmatpush1.bf16.msra.mxu0 0
        %456 = vmatprep.subr.bf16.mxu0 0
        %457 = vmatpush1.bf16.msra.mxu0 0
        %458 = vmatprep.subr.bf16.mxu0 0
        %459 = vmatpush1.bf16.msra.mxu0 0
        %460 = vmatprep.subr.bf16.mxu0 0
        %461 = vmatpush1.bf16.msra.mxu0 0
        %462 = vmatprep.subr.bf16.mxu0 0
        %463 = vmatpush1.bf16.msra.mxu0 0
        %464 = vmatprep.subr.bf16.mxu0 0
        %465 = vmatpush1.bf16.msra.mxu0 0
        %466 = vmatprep.mubr.bf16.mxu0 0
        %467 = vmatmul.mubr.bf16.gmra.mrb[0].mxu0 %v429
        %v468 = vpop.f32.mrb[0].mxu0
        %v469 = vadd.f32 0.0, %v468
        %v470 = vpop.f32.mrb[0].mxu0
        %v471 = vpop.f32.mrb[0].mxu0
        %v472 = vpop.f32.mrb[0].mxu0
        %473 = vdwg.mxu0
        %v474 = vadd.f32 %v423, %v469
        %v475 = vsel %vm277, %v474, -inf
        %476 = vmax.xlane.f32.xlu0 %v475
        %v477 = vpop.xlane.xlu0 %476
        %v478 = vsub.f32 %v474, %v477
        %v479 = vmul.f32 %v478, 1.442695
        %v480 = vpow.pop %v479
        %v481 = vsel %vm277, %v480, 0.0
        %482 = vadd.xlane.f32.xlu0 %v481
        %v483 = vpop.xlane.xlu0 %482
        %v484 = vrcp.pop %v483
        %v485 = vmul.f32 %v483, %v484
        %v486 = vsub.f32 2.0, %v485
        %v487 = vmul.f32 %v484, %v486
        %v488 = vmul.f32 %v480, %v487
        %v489 = vpack.c.bf16 %v488, %v488
        %v491 = vsel %vm277, %v489, 0
        %493 = vmatprep.subr.bf16.mxu0 0
        %494 = vmatpush1.bf16.msra.mxu0 %v331
        %495 = vmatprep.subr.bf16.mxu0 0
        %496 = vmatpush1.bf16.msra.mxu0 0
        %497 = vmatprep.subr.bf16.mxu0 0
        %498 = vmatpush1.bf16.msra.mxu0 0
        %499 = vmatprep.subr.bf16.mxu0 0
        %500 = vmatpush1.bf16.msra.mxu0 0
        %501 = vmatprep.subr.bf16.mxu0 0
        %502 = vmatpush1.bf16.msra.mxu0 0
        %503 = vmatprep.subr.bf16.mxu0 0
        %504 = vmatpush1.bf16.msra.mxu0 0
        %505 = vmatprep.subr.bf16.mxu0 0
        %506 = vmatpush1.bf16.msra.mxu0 0
        %507 = vmatprep.subr.bf16.mxu0 0
        %508 = vmatpush1.bf16.msra.mxu0 0
        %509 = vmatprep.subr.bf16.mxu0 0
        %510 = vmatpush1.bf16.msra.mxu0 0
        %511 = vmatprep.subr.bf16.mxu0 0
        %512 = vmatpush1.bf16.msra.mxu0 0
        %513 = vmatprep.subr.bf16.mxu0 0
        %514 = vmatpush1.bf16.msra.mxu0 0
        %515 = vmatprep.subr.bf16.mxu0 0
        %516 = vmatpush1.bf16.msra.mxu0 0
        %517 = vmatprep.subr.bf16.mxu0 0
        %518 = vmatpush1.bf16.msra.mxu0 0
        %519 = vmatprep.subr.bf16.mxu0 0
        %520 = vmatpush1.bf16.msra.mxu0 0
        %521 = vmatprep.subr.bf16.mxu0 0
        %522 = vmatpush1.bf16.msra.mxu0 0
        %523 = vmatprep.subr.bf16.mxu0 0
        %524 = vmatpush1.bf16.msra.mxu0 0
        %525 = vmatprep.mubr.bf16.mxu0 0
        %526 = vmatmul.mubr.bf16.gmra.mrb[0].mxu0 %v491
        %v527 = vpop.f32.mrb[0].mxu0
        %v528 = vadd.f32 0.0, %v527
        %v529 = vpop.f32.mrb[0].mxu0
        %v530 = vpop.f32.mrb[0].mxu0
        %v531 = vpop.f32.mrb[0].mxu0
        %532 = vdwg.mxu0
        %533 = vst.msk [vmem:[%s200] sm:$0xff] %vm227, %v528
        %s534 = sand.u32 %s97, 1
        %s535 = scalar_lea.sflag [#allocation4], %s534
        %s536 = sand.u32 %s97, 1
        %s537 = smul.addr %s536, 8
        %s538 = scalar_lea.vmem [#allocation7], %s537
        // Predicated region
        $region41: #{tpu_custom_call.1} parent=31 // pred_check
          %p539 = pneg %p107
        $region42: #{tpu_custom_call.1} parent=31 // pred_check_branch
          %541 = sbr.rel (%p539) target = $region44
        $region43: #{tpu_custom_call.1} parent=31 // pred_region
          %s543 = ssub.s32 128, 128
          %544 = vsyncadd %s535, %s543
          %s545 = smul.addr %s21, 128
          %s546 = scalar_lea.hbm %s3, %s545
          %s548 = sshll.u32 %s538, 4
          %s549 = int_to_ptr.vmem [resolvable:$true] %s548
          %551 = dma.vmem_to_hbm [thread:$0]  %s549, 128, %s546, %s535
        $region44: #{tpu_custom_call.1} parent=31 // pred_fallthru
          _
      $region32: #{tpu_custom_call.1} parent=5 // pred_fallthru
        _
      %p552 = scmp.le.s32.totalorder 2, %s16
      // Predicated region
      $region45: #{tpu_custom_call.1} parent=5 // pred_check
        %p553 = pneg %p552
      $region46: #{tpu_custom_call.1} parent=5 // pred_check_branch
        %555 = sbr.rel (%p553) target = $region48
      $region47: #{tpu_custom_call.1} parent=5 // pred_region
        %s556 = ssub.s32 %s16, 2
        // Predicated region
        $region49: #{tpu_custom_call.1} parent=47 // pred_check
          %p557 = pneg %p113
        $region50: #{tpu_custom_call.1} parent=47 // pred_check_branch
          %559 = sbr.rel (%p557) target = $region52
        $region51: #{tpu_custom_call.1} parent=47 // pred_region
          %s560 = sand.u32 %s98, 1
          %s561 = scalar_lea.sflag [#allocation4], %s560
          %s562 = sand.u32 %s98, 1
          %s563 = smul.addr %s562, 8
          %s564 = scalar_lea.vmem [#allocation7], %s563
          %565 = dma.done %s561, 128
        $region52: #{tpu_custom_call.1} parent=47 // pred_fallthru
          _
      $region48: #{tpu_custom_call.1} parent=5 // pred_fallthru
        _
    $region6: #{tpu_custom_call.1} parent=1 // loop_footer
      %s20 = sadd.s32 1, %s16
    $region7: #{tpu_custom_call.1} parent=1 // loop_footer_branch
      %15 = sbr.rel target = $region3
    $region8: #{tpu_custom_call.1} parent=1 // loop_exit
      _
    %566 = vsyncpa [#allocation3], 1
    %s567 = scalar_lea.sflag [#allocation3], 1
    %568 = vsyncpa %s567, 1
    %569 = vsyncpa [#allocation6], 1
    %570 = vsyncpa [#allocation4], 1
    %s571 = scalar_lea.sflag [#allocation4], 1
    %572 = vsyncpa %s571, 1

</llo_original>
